<compile_context>
chip_gen: v6e
topology: v6e:2x2x1
jax: 0.10.0
libtpu: 0.0.40
codegen_flags: <defaults>
</compile_context>

<pallas_src>
import functools

import jax
import jax.numpy as jnp
from jax.experimental import pallas as pl
from jax.experimental.pallas import tpu as pltpu  # noqa: F401  (TPU backend)


# ---------------------------------------------------------------------------
# helpers
# ---------------------------------------------------------------------------
def _softplus_ref(x):
    # numerically-stable softplus (matches F.softplus) for the pure-JAX reference
    return jnp.maximum(x, 0.0) + jnp.log1p(jnp.exp(-jnp.abs(x)))


def _align8(n):
    return ((n + 7) // 8) * 8


def _pack_params_slab(named_mats):
    """Stack 2-D matrices row-wise into one fp32 slab (single HBM->VMEM DMA).

    Each section starts on an 8-row (sublane-tile) boundary and is zero-padded
    to the common lane width.  Returns (slab, {name: (row0, rows, cols)}).
    """
    cols = max(int(m.shape[1]) for _, m in named_mats)
    layout = {}
    blocks = []
    row = 0
    for name, m in named_mats:
        r, c = int(m.shape[0]), int(m.shape[1])
        layout[name] = (row, r, c)
        r_pad = _align8(row + r) - (row + r)        # next section starts 8-aligned
        blocks.append(jnp.pad(m.astype(jnp.float32), ((0, r_pad), (0, cols - c))))
        row += r + r_pad
    slab = jnp.concatenate(blocks, axis=0)
    return slab, layout


# ---------------------------------------------------------------------------
# The single fused kernel
# ---------------------------------------------------------------------------
def _make_fused_kernel(*, B, L, D, P, H, C, n_layers, layout, scale_row, args_row):
    """Build the fused forward kernel.

    Refs: x_ref (B*L, F) value+temporal inputs concatenated along features,
          p_ref (R, Wmax) packed parameter slab,
          out_ref (rows, cols) packed output slab:
              rows [scale_row, scale_row+B)   cols [0, D)    -> mean-abs affine scale
              rows [args_row,  args_row+B*C)  cols [0, 3*P)  -> domain-mapped distr args
    """

    def view(ref, name):
        r0, r, c = layout[name]
        return ref[r0:r0 + r, 0:c]            # static, 8-aligned row offset -> cheap load

    def softplus(v):
        # stable softplus using exp/log (guaranteed Mosaic lowerings)
        return jnp.maximum(v, 0.0) + jnp.log(1.0 + jnp.exp(-jnp.abs(v)))

    def kernel(x_ref, p_ref, out_ref):
        # --- DataEmbedding (value + temporal) as ONE matmul for the whole batch ---
        wcat = view(p_ref, "wcat")             # (F, D)
        bcat = view(p_ref, "bcat")             # (1, D)
        emb = jnp.dot(x_ref[...], wcat, preferred_element_type=jnp.float32) + bcat  # (B*L, D)

        # --- mean-abs scaling (per batch) + transpose; stack to (B*D, L) ---
        scales = []
        h_blocks = []
        for b in range(B):                     # tiny static unroll; only VPU/XLU ops here
            emb_b = emb[b * L:(b + 1) * L, :]                              # (L, D)
            s = jnp.maximum(jnp.mean(jnp.abs(emb_b), axis=0, keepdims=True), 1e-5)
            scales.append(s)
            h_blocks.append((emb_b / s).T)     # exact division (approx recip removed)
        scale_all = jnp.concatenate(scales, axis=0)                        # (B, D)
        h = jnp.concatenate(h_blocks, axis=0)                              # (B*D, L)

        # --- MLP over the time axis: ONE dot per layer for the whole batch ---
        for i in range(n_layers):
            w = view(p_ref, f"w{i}")
            bias = view(p_ref, f"b{i}")
            h = jnp.dot(h, w, preferred_element_type=jnp.float32) + bias
            if i < n_layers - 1:               # ReLU after hidden layers only
                h = jnp.maximum(h, 0.0)
        # h: (B*D, P*H)

        # --- d_model -> c_out projection, batched via block-diagonal Wp.T: one dot ---
        wptb = view(p_ref, "wptb")                                         # (B*C, B*D)
        hw = jnp.dot(wptb, h, preferred_element_type=jnp.float32)          # (B*C, P*H)

        # --- StudentT args projection, all P horizons via block-diag Wargs: one dot ---
        wargs_blk = view(p_ref, "wargs_blk")                               # (P*H, 3*P)
        argb = view(p_ref, "argb")                                         # (B*C, 3*P) folded bias
        raw = jnp.dot(hw, wargs_blk, preferred_element_type=jnp.float32) + argb

        # --- StudentTOutput.domain_map: df = 2 + softplus, loc = id, scale = softplus ---
        sp = softplus(raw)
        col = jax.lax.broadcasted_iota(jnp.int32, raw.shape, 1) % 3        # computed ONCE
        mapped = jnp.where(col == 0, 2.0 + sp, jnp.where(col == 1, raw, sp))

        # --- each output section stored exactly once (8-aligned row offsets) ---
        out_ref[scale_row:scale_row + B, 0:D] = scale_all
        out_ref[args_row:args_row + B * C, 0:3 * P] = mapped

    return kernel


# ---------------------------------------------------------------------------
# Full forward: one fused pallas_call + tiny wrapper glue
# ---------------------------------------------------------------------------
def mlp_proba_forward(params, x, x_mark, *, pred_len, dims, c_out):
    B, L, c_in = x.shape
    d_inp = x_mark.shape[-1]
    D = params["wv"].shape[1]
    H = dims[-1]
    P = pred_len
    C = c_out
    F = c_in + d_inp
    n_layers = len(params["mlp"])

    # --- inputs: one lane-concatenated 2-D block (single DMA) ---
    xcat = jnp.concatenate([x, x_mark], axis=-1).reshape(B * L, F).astype(jnp.float32)

    # --- parameter prep (tiny XLA ops): collapse the two embeddings, build
    #     block-diagonal projection / args matrices, fold the projection bias ---
    wcat = jnp.concatenate([params["wv"], params["wt"]], axis=0)            # (F, D)
    bcat = params["bv"] + params["bt"]                                      # (1, D)
    wpt = params["wp"].T                                                    # (C, D)
    wptb = jnp.kron(jnp.eye(B, dtype=jnp.float32), wpt)                     # (B*C, B*D)
    wargs = params["wargs"]                                                 # (H, 3)
    wargs_blk = jnp.kron(jnp.eye(P, dtype=jnp.float32), wargs)              # (P*H, 3*P)
    argb = params["bp"].T @ jnp.sum(wargs, axis=0, keepdims=True) + params["bargs"]  # (C, 3)
    argb_full = jnp.tile(argb, (B, P))                                      # (B*C, 3*P)

    named = [("wcat", wcat), ("bcat", bcat)]
    for i, (w, b) in enumerate(params["mlp"]):
        named += [(f"w{i}", w), (f"b{i}", b)]
    named += [("wptb", wptb), ("wargs_blk", wargs_blk), ("argb", argb_full)]
    slab, layout = _pack_params_slab(named)                                 # ONE param DMA

    # --- packed output slab (one output DMA; each section stored once) ---
    out_cols = max(D, 3 * P)
    scale_row = 0
    args_row = _align8(B)
    out_rows = args_row + _align8(B * C)

    kernel = _make_fused_kernel(B=B, L=L, D=D, P=P, H=H, C=C, n_layers=n_layers,
                                layout=layout, scale_row=scale_row, args_row=args_row)

    out = pl.pallas_call(
        kernel,
        out_shape=jax.ShapeDtypeStruct((out_rows, out_cols), jnp.float32),
    )(xcat, slab)

    # unpack + reorder (b, c', q, a) -> torch's (b, p, c, a); flat j = c'*P + q = p*C + c.
    scale_out = out[scale_row:scale_row + B, 0:D].reshape(B, 1, D)
    args = out[args_row:args_row + B * C, 0:3 * P].reshape(B, P, C, 3)
    df, loc, scale_param = args[..., 0], args[..., 1], args[..., 2]
    # TODO(synk): torch.distributions.StudentT / TransformedDistribution has no Pallas
    # equivalent; we return the distribution parameters plus the affine (mean-abs) scale.
    return df, loc, scale_param, scale_out


# ---------------------------------------------------------------------------
# Pure-JAX reference (mirrors the torch module exactly; no fusion tricks)
# ---------------------------------------------------------------------------
def reference(params, x, x_mark, *, pred_len, dims, c_out):
    emb = (x @ params["wv"] + params["bv"] + x_mark @ params["wt"] + params["bt"])
    scale = jnp.maximum(jnp.mean(jnp.abs(emb), axis=1, keepdims=True), 1e-5)
    xs = emb / scale
    h = jnp.transpose(xs, (0, 2, 1))
    n = len(params["mlp"])
    for i, (w, b) in enumerate(params["mlp"]):
        h = h @ w + b
        if i < n - 1:
            h = jnp.maximum(h, 0.0)
    h = jnp.transpose(h, (0, 2, 1))
    proj = h @ params["wp"] + params["bp"]
    proj = jnp.transpose(proj, (0, 2, 1))
    B = proj.shape[0]
    H = dims[-1]
    x4 = proj.reshape(B, pred_len, c_out, H)
    raw = x4 @ params["wargs"] + params["bargs"]
    sp = _softplus_ref(raw)
    return 2.0 + sp[..., 0], raw[..., 1], sp[..., 2], scale


# ---------------------------------------------------------------------------
def init_params(key, *, c_in, c_out, d_model, d_inp, hist_len, pred_len, dims):
    keys = jax.random.split(key, 16)
    p = {}
    p["wv"] = 0.1 * jax.random.normal(keys[0], (c_in, d_model), jnp.float32)
    p["bv"] = 0.01 * jax.random.normal(keys[1], (1, d_model), jnp.float32)
    p["wt"] = 0.1 * jax.random.normal(keys[2], (d_inp, d_model), jnp.float32)
    p["bt"] = 0.01 * jax.random.normal(keys[3], (1, d_model), jnp.float32)
    mlp = []
    in_dim = hist_len
    kk = 4
    for units in dims:
        w = 0.1 * jax.random.normal(keys[kk], (in_dim, units), jnp.float32)
        b = 0.01 * jax.random.normal(keys[kk + 1], (1, units), jnp.float32)
        mlp.append((w, b))
        in_dim = units
        kk += 2
    w = 0.1 * jax.random.normal(keys[kk], (dims[-1], pred_len * dims[-1]), jnp.float32)
    b = 0.01 * jax.random.normal(keys[kk + 1], (1, pred_len * dims[-1]), jnp.float32)
    mlp.append((w, b))
    kk += 2
    p["mlp"] = mlp
    p["wp"] = 0.1 * jax.random.normal(keys[kk], (d_model, c_out), jnp.float32)
    p["bp"] = 0.01 * jax.random.normal(keys[kk + 1], (1, c_out), jnp.float32)
    kk += 2
    p["wargs"] = 0.1 * jax.random.normal(keys[kk], (dims[-1], 3), jnp.float32)
    p["bargs"] = 0.01 * jax.random.normal(keys[kk + 1], (1, 3), jnp.float32)
    return p


if __name__ == "__main__":
    # Small config consistent with the module's forward pass.
    B, c_in, c_out, d_model = 2, 4, 3, 16
    hist_len, pred_len = 8, 2
    dims = [32, 16]          # num_hidden_dimensions
    d_inp = 5                # freq='H' -> 5 time features

    key = jax.random.PRNGKey(0)
    kx, kxm, kym, kp = jax.random.split(key, 4)
    x = jax.random.normal(kx, (B, hist_len, c_in), jnp.float32)
    x_mark = jax.random.normal(kxm, (B, hist_len, d_inp), jnp.float32)
    y_mark = jax.random.normal(kym, (B, pred_len, d_inp), jnp.float32)  # unused by forward

    params = init_params(kp, c_in=c_in, c_out=c_out, d_model=d_model,
                         d_inp=d_inp, hist_len=hist_len, pred_len=pred_len, dims=dims)

    fwd = jax.jit(functools.partial(mlp_proba_forward,
                                    pred_len=pred_len, dims=dims, c_out=c_out))
    df, loc, scale_param, affine_scale = jax.block_until_ready(fwd(params, x, x_mark))

    # verify against pure-JAX reference
    rdf, rloc, rsc, rscale = reference(params, x, x_mark,
                                       pred_len=pred_len, dims=dims, c_out=c_out)
    assert df.shape == (B, pred_len, c_out)
    assert loc.shape == (B, pred_len, c_out)
    assert scale_param.shape == (B, pred_len, c_out)
    assert affine_scale.shape == (B, 1, d_model)
    # exact division + f32 MXU matmuls -> tight numerics (approx reciprocal removed)
    assert jnp.allclose(affine_scale, rscale, atol=1e-4, rtol=1e-4)
    assert jnp.allclose(df, rdf, atol=2e-3, rtol=2e-3)
    assert jnp.allclose(loc, rloc, atol=2e-3, rtol=2e-3)
    assert jnp.allclose(scale_param, rsc, atol=2e-3, rtol=2e-3)

    print("KERNEL_OK")
</pallas_src>

<mosaic_0001>
module attributes {stable_mosaic.version = 11 : i64} {
  func.func @kernel(%arg0: memref<16x9xf32, #tpu.memory_space<vmem>>, %arg1: memref<152x32xf32, #tpu.memory_space<vmem>>, %arg2: memref<16x16xf32, #tpu.memory_space<vmem>>) attributes {dimension_semantics = [], scalar_prefetch = 0 : i64, scratch_operands = 0 : i64, tpu.core_type = #tpu.core_type<tc>} {
    %c0 = arith.constant 0 : index
    %c0_0 = arith.constant 0 : index
    %0 = vector.load %arg1[%c0, %c0_0] : memref<152x32xf32, #tpu.memory_space<vmem>>, vector<9x16xf32>
    %c16 = arith.constant 16 : index
    %c0_1 = arith.constant 0 : index
    %1 = vector.load %arg1[%c16, %c0_1] : memref<152x32xf32, #tpu.memory_space<vmem>>, vector<1x16xf32>
    %c0_2 = arith.constant 0 : index
    %c0_3 = arith.constant 0 : index
    %2 = vector.load %arg0[%c0_2, %c0_3] : memref<16x9xf32, #tpu.memory_space<vmem>>, vector<16x9xf32>
    %cst = arith.constant dense<0.000000e+00> : vector<16x16xf32>
    %3 = tpu.matmul %2, %0, %cst {dimension_numbers = #tpu.dot_dimension_numbers<[1], [0], [0], [1], [0, 0, 1, 1], [], []>} : vector<16x9xf32>, vector<9x16xf32>, vector<16x16xf32> -> vector<16x16xf32>
    %4 = vector.broadcast %1 : vector<1x16xf32> to vector<16x16xf32>
    %5 = arith.addf %3, %4 : vector<16x16xf32>
    %6 = vector.extract_strided_slice %5 {offsets = [0, 0], sizes = [8, 16], strides = [1, 1]} : vector<16x16xf32> to vector<8x16xf32>
    %7 = math.absf %6 : vector<8x16xf32>
    %cst_4 = arith.constant dense<0.000000e+00> : vector<16xf32>
    %8 = vector.multi_reduction <add>, %7, %cst_4 [0] : vector<8x16xf32> to vector<16xf32>
    %9 = vector.shape_cast %8 : vector<16xf32> to vector<1x16xf32>
    %cst_5 = arith.constant 8.000000e+00 : f32
    %10 = vector.broadcast %cst_5 : f32 to vector<1x16xf32>
    %11 = arith.divf %9, %10 : vector<1x16xf32>
    %cst_6 = arith.constant 9.99999974E-6 : f32
    %12 = vector.broadcast %cst_6 : f32 to vector<1x16xf32>
    %13 = arith.maximumf %11, %12 : vector<1x16xf32>
    %14 = vector.broadcast %13 : vector<1x16xf32> to vector<8x16xf32>
    %15 = arith.divf %6, %14 : vector<8x16xf32>
    %16 = tpu.transpose %15, [1, 0] : vector<8x16xf32> -> vector<16x8xf32>
    %17 = vector.extract_strided_slice %5 {offsets = [8, 0], sizes = [8, 16], strides = [1, 1]} : vector<16x16xf32> to vector<8x16xf32>
    %18 = math.absf %17 : vector<8x16xf32>
    %cst_7 = arith.constant dense<0.000000e+00> : vector<16xf32>
    %19 = vector.multi_reduction <add>, %18, %cst_7 [0] : vector<8x16xf32> to vector<16xf32>
    %20 = vector.shape_cast %19 : vector<16xf32> to vector<1x16xf32>
    %cst_8 = arith.constant 8.000000e+00 : f32
    %21 = vector.broadcast %cst_8 : f32 to vector<1x16xf32>
    %22 = arith.divf %20, %21 : vector<1x16xf32>
    %cst_9 = arith.constant 9.99999974E-6 : f32
    %23 = vector.broadcast %cst_9 : f32 to vector<1x16xf32>
    %24 = arith.maximumf %22, %23 : vector<1x16xf32>
    %25 = vector.broadcast %24 : vector<1x16xf32> to vector<8x16xf32>
    %26 = arith.divf %17, %25 : vector<8x16xf32>
    %27 = tpu.transpose %26, [1, 0] : vector<8x16xf32> -> vector<16x8xf32>
    %28 = tpu.concatenate %13, %24 in 0 : vector<1x16xf32>, vector<1x16xf32> -> vector<2x16xf32>
    %29 = tpu.concatenate %16, %27 in 0 : vector<16x8xf32>, vector<16x8xf32> -> vector<32x8xf32>
    %c24 = arith.constant 24 : index
    %c0_10 = arith.constant 0 : index
    %30 = vector.load %arg1[%c24, %c0_10] : memref<152x32xf32, #tpu.memory_space<vmem>>, vector<8x32xf32>
    %c32 = arith.constant 32 : index
    %c0_11 = arith.constant 0 : index
    %31 = vector.load %arg1[%c32, %c0_11] : memref<152x32xf32, #tpu.memory_space<vmem>>, vector<1x32xf32>
    %cst_12 = arith.constant dense<0.000000e+00> : vector<32x32xf32>
    %32 = tpu.matmul %29, %30, %cst_12 {dimension_numbers = #tpu.dot_dimension_numbers<[1], [0], [0], [1], [0, 0, 1, 1], [], []>} : vector<32x8xf32>, vector<8x32xf32>, vector<32x32xf32> -> vector<32x32xf32>
    %33 = vector.broadcast %31 : vector<1x32xf32> to vector<32x32xf32>
    %34 = arith.addf %32, %33 : vector<32x32xf32>
    %cst_13 = arith.constant 0.000000e+00 : f32
    %35 = vector.broadcast %cst_13 : f32 to vector<32x32xf32>
    %36 = arith.maximumf %34, %35 : vector<32x32xf32>
    %c40 = arith.constant 40 : index
    %c0_14 = arith.constant 0 : index
    %37 = vector.load %arg1[%c40, %c0_14] : memref<152x32xf32, #tpu.memory_space<vmem>>, vector<32x16xf32>
    %c72 = arith.constant 72 : index
    %c0_15 = arith.constant 0 : index
    %38 = vector.load %arg1[%c72, %c0_15] : memref<152x32xf32, #tpu.memory_space<vmem>>, vector<1x16xf32>
    %cst_16 = arith.constant dense<0.000000e+00> : vector<32x16xf32>
    %39 = tpu.matmul %36, %37, %cst_16 {dimension_numbers = #tpu.dot_dimension_numbers<[1], [0], [0], [1], [0, 0, 1, 1], [], []>} : vector<32x32xf32>, vector<32x16xf32>, vector<32x16xf32> -> vector<32x16xf32>
    %40 = vector.broadcast %38 : vector<1x16xf32> to vector<32x16xf32>
    %41 = arith.addf %39, %40 : vector<32x16xf32>
    %cst_17 = arith.constant 0.000000e+00 : f32
    %42 = vector.broadcast %cst_17 : f32 to vector<32x16xf32>
    %43 = arith.maximumf %41, %42 : vector<32x16xf32>
    %c80 = arith.constant 80 : index
    %c0_18 = arith.constant 0 : index
    %44 = vector.load %arg1[%c80, %c0_18] : memref<152x32xf32, #tpu.memory_space<vmem>>, vector<16x32xf32>
    %c96 = arith.constant 96 : index
    %c0_19 = arith.constant 0 : index
    %45 = vector.load %arg1[%c96, %c0_19] : memref<152x32xf32, #tpu.memory_space<vmem>>, vector<1x32xf32>
    %cst_20 = arith.constant dense<0.000000e+00> : vector<32x32xf32>
    %46 = tpu.matmul %43, %44, %cst_20 {dimension_numbers = #tpu.dot_dimension_numbers<[1], [0], [0], [1], [0, 0, 1, 1], [], []>} : vector<32x16xf32>, vector<16x32xf32>, vector<32x32xf32> -> vector<32x32xf32>
    %47 = vector.broadcast %45 : vector<1x32xf32> to vector<32x32xf32>
    %48 = arith.addf %46, %47 : vector<32x32xf32>
    %c104 = arith.constant 104 : index
    %c0_21 = arith.constant 0 : index
    %49 = vector.load %arg1[%c104, %c0_21] : memref<152x32xf32, #tpu.memory_space<vmem>>, vector<6x32xf32>
    %cst_22 = arith.constant dense<0.000000e+00> : vector<6x32xf32>
    %50 = tpu.matmul %49, %48, %cst_22 {dimension_numbers = #tpu.dot_dimension_numbers<[1], [0], [0], [1], [0, 0, 1, 1], [], []>} : vector<6x32xf32>, vector<32x32xf32>, vector<6x32xf32> -> vector<6x32xf32>
    %c112 = arith.constant 112 : index
    %c0_23 = arith.constant 0 : index
    %51 = vector.load %arg1[%c112, %c0_23] : memref<152x32xf32, #tpu.memory_space<vmem>>, vector<32x6xf32>
    %c144 = arith.constant 144 : index
    %c0_24 = arith.constant 0 : index
    %52 = vector.load %arg1[%c144, %c0_24] : memref<152x32xf32, #tpu.memory_space<vmem>>, vector<6x6xf32>
    %cst_25 = arith.constant dense<0.000000e+00> : vector<6x6xf32>
    %53 = tpu.matmul %50, %51, %cst_25 {dimension_numbers = #tpu.dot_dimension_numbers<[1], [0], [0], [1], [0, 0, 1, 1], [], []>} : vector<6x32xf32>, vector<32x6xf32>, vector<6x6xf32> -> vector<6x6xf32>
    %54 = arith.addf %53, %52 : vector<6x6xf32>
    %cst_26 = arith.constant 0.000000e+00 : f32
    %55 = vector.broadcast %cst_26 : f32 to vector<6x6xf32>
    %56 = arith.maximumf %54, %55 : vector<6x6xf32>
    %57 = math.absf %54 : vector<6x6xf32>
    %cst_27 = arith.constant 0.000000e+00 : f32
    %58 = vector.broadcast %cst_27 : f32 to vector<6x6xf32>
    %59 = arith.subf %58, %57 : vector<6x6xf32>
    %60 = math.exp %59 : vector<6x6xf32>
    %cst_28 = arith.constant 1.000000e+00 : f32
    %61 = vector.broadcast %cst_28 : f32 to vector<6x6xf32>
    %62 = arith.addf %61, %60 : vector<6x6xf32>
    %63 = math.log %62 : vector<6x6xf32>
    %64 = arith.addf %56, %63 : vector<6x6xf32>
    %65 = tpu.iota {dimensions = array<i32: 1>} : vector<6x6xi32>
    %c3_i32 = arith.constant 3 : i32
    %c0_i32 = arith.constant 0 : i32
    %66 = arith.cmpi eq, %c3_i32, %c0_i32 : i32
    %c1_i32 = arith.constant 1 : i32
    %67 = arith.select %66, %c1_i32, %c3_i32 : i32
    %68 = vector.broadcast %67 : i32 to vector<6x6xi32>
    %69 = arith.remsi %65, %68 : vector<6x6xi32>
    %c0_i32_29 = arith.constant 0 : i32
    %70 = vector.broadcast %c0_i32_29 : i32 to vector<6x6xi32>
    %71 = arith.cmpi ne, %69, %70 : vector<6x6xi32>
    %c0_i32_30 = arith.constant 0 : i32
    %72 = vector.broadcast %c0_i32_30 : i32 to vector<6x6xi32>
    %73 = arith.cmpi slt, %69, %72 : vector<6x6xi32>
    %c0_i32_31 = arith.constant 0 : i32
    %74 = arith.cmpi slt, %67, %c0_i32_31 : i32
    %75 = vector.broadcast %74 : i1 to vector<6x6xi1>
    %76 = vector.broadcast %75 : vector<6x6xi1> to vector<6x6xi1>
    %77 = arith.xori %73, %76 : vector<6x6xi1>
    %78 = arith.andi %77, %71 : vector<6x6xi1>
    %79 = vector.broadcast %67 : i32 to vector<6x6xi32>
    %80 = arith.addi %69, %79 : vector<6x6xi32>
    %81 = arith.select %78, %80, %69 : vector<6x6xi1>, vector<6x6xi32>
    %c0_i32_32 = arith.constant 0 : i32
    %82 = vector.broadcast %c0_i32_32 : i32 to vector<6x6xi32>
    %83 = arith.cmpi eq, %81, %82 : vector<6x6xi32>
    %cst_33 = arith.constant 2.000000e+00 : f32
    %84 = vector.broadcast %cst_33 : f32 to vector<6x6xf32>
    %85 = arith.addf %84, %64 : vector<6x6xf32>
    %c1_i32_34 = arith.constant 1 : i32
    %86 = vector.broadcast %c1_i32_34 : i32 to vector<6x6xi32>
    %87 = arith.cmpi eq, %81, %86 : vector<6x6xi32>
    %88 = arith.select %87, %54, %64 : vector<6x6xi1>, vector<6x6xf32>
    %89 = arith.select %83, %85, %88 : vector<6x6xi1>, vector<6x6xf32>
    %c0_35 = arith.constant 0 : index
    %c0_36 = arith.constant 0 : index
    %90 = vector.load %arg2[%c0_35, %c0_36] : memref<16x16xf32, #tpu.memory_space<vmem>>, vector<2x16xf32>
    tpu.vector_store %arg2[%c0_35, %c0_36], %28 {strides = array<i32>} : memref<16x16xf32, #tpu.memory_space<vmem>>, vector<2x16xf32>,
    %c8 = arith.constant 8 : index
    %c0_37 = arith.constant 0 : index
    %91 = vector.load %arg2[%c8, %c0_37] : memref<16x16xf32, #tpu.memory_space<vmem>>, vector<6x6xf32>
    tpu.vector_store %arg2[%c8, %c0_37], %89 {strides = array<i32>} : memref<16x16xf32, #tpu.memory_space<vmem>>, vector<6x6xf32>,
    return
  }
}

</mosaic_0001>

<llo_original>
// kernel: tile.8
$region0: #{tile.8}
  #allocation0 [shape = 's32[1]{0}', space=sflag, size = 0x4, scoped, tag = 'scoped memory for tile.8']
  %s0 = inlined_call_operand.vmem [shape: f32[3,3], index: 0, kind: input, shape index: {}]
  %s1 = inlined_call_operand.vmem [shape: f32[2,3,2,3], index: 1, kind: output, shape index: {}]
  // Predicated region
  $region2: #{tile.8} parent=0 // pred_check
    _
  $region3: #{tile.8} parent=0 // pred_check_branch
    %3 = sbr.rel (0) target = $region5
  $region4: #{tile.8} parent=0 // pred_region
    _
  $region5: #{tile.8} parent=0 // pred_fallthru
    _
  %v4 = vld [vmem:[%s0] ss:$0 sm:$0xff]
  %5 = vst [vmem:[%s1] sm:$0x3] %v4
  %s6 = scalar_lea.vmem %s1, 6
  %7 = vst [vmem:[%s6] sm:$0x3] %v4
  %s8 = scalar_lea.vmem %s0, 1
  %v9 = vld [vmem:[%s8] ss:$0 sm:$0xff]
  %s10 = scalar_lea.vmem %s1, 2
  %11 = vst [vmem:[%s10] sm:$0x3] %v9
  %s12 = scalar_lea.vmem %s1, 8
  %13 = vst [vmem:[%s12] sm:$0x3] %v9
  %s14 = scalar_lea.vmem %s0, 2
  %v15 = vld [vmem:[%s14] ss:$0 sm:$0xff]
  %s16 = scalar_lea.vmem %s1, 4
  %17 = vst [vmem:[%s16] sm:$0x3] %v15
  %s18 = scalar_lea.vmem %s1, 10
  %19 = vst [vmem:[%s18] sm:$0x3] %v15

// kernel: tile.9
$region0: #{tile.9}
  %s0 = inlined_call_operand.vmem [shape: f32[2,3,2,3], index: 0, kind: input, shape index: {}]
  %s1 = inlined_call_operand.vmem [shape: f32[6,6], index: 1, kind: output, shape index: {}]
  $region1: #{tile.9} parent=0
    #allocation0 [shape = 'u8[24576]{0}', space=vmem, size = 0x6000, scoped, tag = 'scoped mem for input reshape']
    %s3 = sshll.u32 1, 2
    %s4 = ssub.s32 %s3, 1
    %s5 = smul.addr 2, 5
    %s6 = scalar_lea.vmem %s0, %s5
    %v7 = vld [vmem:[%s6] sm:%s4]
    %s8 = scalar_lea.vmem [#allocation0], 40
    %9 = vst [vmem:[%s8] sm:%s4] %v7
    %s10 = smul.addr 2, 4
    %s11 = scalar_lea.vmem %s0, %s10
    %v12 = vld [vmem:[%s11] sm:%s4]
    %s13 = scalar_lea.vmem [#allocation0], 32
    %14 = vst [vmem:[%s13] sm:%s4] %v12
    %s15 = smul.addr 2, 3
    %s16 = scalar_lea.vmem %s0, %s15
    %v17 = vld [vmem:[%s16] sm:%s4]
    %s18 = scalar_lea.vmem [#allocation0], 24
    %19 = vst [vmem:[%s18] sm:%s4] %v17
    %s20 = smul.addr 2, 2
    %s21 = scalar_lea.vmem %s0, %s20
    %v22 = vld [vmem:[%s21] sm:%s4]
    %s23 = scalar_lea.vmem [#allocation0], 16
    %24 = vst [vmem:[%s23] sm:%s4] %v22
    %s25 = scalar_lea.vmem %s0, 2
    %v26 = vld [vmem:[%s25] sm:%s4]
    %s27 = scalar_lea.vmem [#allocation0], 8
    %28 = vst [vmem:[%s27] sm:%s4] %v26
    %v29 = vld [vmem:[%s0] sm:%s4]
    %30 = vst [vmem:[#allocation0] sm:%s4] %v29
    %v31 = vld [vmem:[#allocation0] ss:$8 sm:$0xf]
    %s32 = smov 48
    %v33 = vld [vmem:[#allocation0] ss:$8 sm:%s32]
    %vm34 = vcmask 1045508
    %v35 = vsel %vm34, %v33, %v31
    %vm36 = vcmask 23552
    %37 = vst.msk [vmem:[%s1] sm:$0x3f] %vm36, %v35
    %s38 = scalar_lea.vmem [#allocation0], 1
    %v39 = vld [vmem:[%s38] ss:$8 sm:$0xf]
    %s40 = scalar_lea.vmem [#allocation0], 1
    %s41 = smov 48
    %v42 = vld [vmem:[%s40] ss:$8 sm:%s41]
    %vm43 = vcmask 1045508
    %v44 = vsel %vm43, %v42, %v39
    %45 = vrot.lane.b32.xlu0 %v44, 3
    %v46 = vpop.permute.xlu0 %45
    %vm47 = vcmask 48152
    %48 = vst.msk [vmem:[%s1] sm:$0x3f] %vm47, %v46

// kernel: mlp_proba_forward.1
$region0: #{mlp_proba_forward.1}
  #allocation0 [shape = 'u32[]', space=smem, size = 0x4, offset = 0x4, fixed_abs, tag = 'smem constant byte address 0x4 - core index']
  #allocation1 [shape = 'u32[144,128]{1,0:T(1,128)}', space=vmem, size = 0x12000, scoped, tag = 'internal scratch']
  %s0 = inlined_call_operand.vmem [shape: f32[16,9], index: 0, kind: input, shape index: {}]
  %s1 = inlined_call_operand.vmem [shape: f32[152,32], index: 1, kind: input, shape index: {}]
  %s2 = inlined_call_operand.vmem [shape: f32[16,16], index: 2, kind: output, shape index: {}]
  %s3 = sld [smem:[#allocation0]]
  $region18: #{mlp_proba_forward.1} parent=0
    _
  %s5 = ssub.s32 1, %s3
  %s6 = scalar_select 0, %s5, %s3
  // Predicated region
  $region2: #{mlp_proba_forward.1} parent=0 // pred_check
    _
  $region3: #{mlp_proba_forward.1} parent=0 // pred_check_branch
    %8 = sbr.rel (0) target = $region5
  $region4: #{mlp_proba_forward.1} parent=0 // pred_region
    _
  $region5: #{mlp_proba_forward.1} parent=0 // pred_fallthru
    _
  // Predicated region
  $region6: #{mlp_proba_forward.1} parent=0 // pred_check
    _
  $region7: #{mlp_proba_forward.1} parent=0 // pred_check_branch
    %10 = sbr.rel (0) target = $region9
  $region8: #{mlp_proba_forward.1} parent=0 // pred_region
    _
  $region9: #{mlp_proba_forward.1} parent=0 // pred_fallthru
    _
  %v11 = vld [vmem:[%s1] sm:$0xff]
  %v12 = vld [vmem:[%s1 + $0x8] sm:$0x1]
  %v13 = vld [vmem:[%s1 + $0x10] sm:$0x1]
  %v14 = vld [vmem:[%s0] sm:$0xff]
  %v15 = vld [vmem:[%s0 + $0x8] sm:$0xff]
  %v16 = vlaneseq
  %v17 = vshrl.u32 %v16, 7
  %v18 = vsub.s32 0, %v17
  %v19 = vrot.slane %v13, %v18
  %vm20 = vcmask 72704
  %v22 = vsel %vm20, %v14, 0
  %v25 = vsel %vm20, %v15, 0
  %vm27 = vcmask 1040384
  %v29 = vsel %vm27, %v12, 0
  %31 = vmatprep.subr.mxu0 0.0
  %32 = vmatpush1.msra.mxu0 0.0
  %33 = vmatprep.subr.mxu0 0.0
  %34 = vmatpush1.msra.mxu0 0.0
  %35 = vmatprep.subr.mxu0 0.0
  %36 = vmatpush1.msra.mxu0 0.0
  %37 = vmatprep.subr.mxu0 0.0
  %38 = vmatpush1.msra.mxu0 0.0
  %39 = vmatprep.subr.mxu0 0.0
  %40 = vmatpush1.msra.mxu0 0.0
  %41 = vmatprep.subr.mxu0 0.0
  %42 = vmatpush1.msra.mxu0 0.0
  %43 = vmatprep.subr.mxu0 0.0
  %44 = vmatpush1.msra.mxu0 0.0
  %45 = vmatprep.subr.mxu0 0.0
  %46 = vmatpush1.msra.mxu0 0.0
  %47 = vmatprep.subr.mxu0 0.0
  %48 = vmatpush1.msra.mxu0 0.0
  %49 = vmatprep.subr.mxu0 0.0
  %50 = vmatpush1.msra.mxu0 0.0
  %51 = vmatprep.subr.mxu0 0.0
  %52 = vmatpush1.msra.mxu0 0.0
  %53 = vmatprep.subr.mxu0 0.0
  %54 = vmatpush1.msra.mxu0 0.0
  %55 = vmatprep.subr.mxu0 0.0
  %56 = vmatpush1.msra.mxu0 0.0
  %57 = vmatprep.subr.mxu0 0.0
  %58 = vmatpush1.msra.mxu0 0.0
  %59 = vmatprep.subr.mxu0 0.0
  %60 = vmatpush1.msra.mxu0 %v29
  %61 = vmatprep.subr.mxu0 0.0
  %62 = vmatpush1.msra.mxu0 %v11
  %63 = vmatprep.subr.mxu0 0.0
  %64 = vmatpush2.msra.mxu0 0.0
  %65 = vmatprep.subr.mxu0 0.0
  %66 = vmatpush2.msra.mxu0 0.0
  %67 = vmatprep.subr.mxu0 0.0
  %68 = vmatpush2.msra.mxu0 0.0
  %69 = vmatprep.subr.mxu0 0.0
  %70 = vmatpush2.msra.mxu0 0.0
  %71 = vmatprep.subr.mxu0 0.0
  %72 = vmatpush2.msra.mxu0 0.0
  %73 = vmatprep.subr.mxu0 0.0
  %74 = vmatpush2.msra.mxu0 0.0
  %75 = vmatprep.subr.mxu0 0.0
  %76 = vmatpush2.msra.mxu0 0.0
  %77 = vmatprep.subr.mxu0 0.0
  %78 = vmatpush2.msra.mxu0 0.0
  %79 = vmatprep.subr.mxu0 0.0
  %80 = vmatpush2.msra.mxu0 0.0
  %81 = vmatprep.subr.mxu0 0.0
  %82 = vmatpush2.msra.mxu0 0.0
  %83 = vmatprep.subr.mxu0 0.0
  %84 = vmatpush2.msra.mxu0 0.0
  %85 = vmatprep.subr.mxu0 0.0
  %86 = vmatpush2.msra.mxu0 0.0
  %87 = vmatprep.subr.mxu0 0.0
  %88 = vmatpush2.msra.mxu0 0.0
  %89 = vmatprep.subr.mxu0 0.0
  %90 = vmatpush2.msra.mxu0 0.0
  %91 = vmatprep.subr.mxu0 0.0
  %92 = vmatpush2.msra.mxu0 0.0
  %93 = vmatprep.subr.mxu0 0.0
  %94 = vmatpush2.msra.mxu0 0.0
  %95 = vmatprep.mubr.f32.mxu0 0.0
  %96 = vmatmul.mubr.f32.gmra.mxu0 %v22
  %v97 = vpop.f32.mrf.mxu0
  %v98 = vadd.f32 %v19, %v97
  %v99 = vpop.f32.mrf.mxu0
  %100 = vmatprep.mubr.f32.mxu0 0.0
  %101 = vmatmul.mubr.f32.gmra.mxu0 %v25
  %v102 = vpop.f32.mrf.mxu0
  %v103 = vadd.f32 %v19, %v102
  %v104 = vpop.f32.mrf.mxu0
  %105 = vdwg.mxu0
  %v106 = vand.u32 2147483647, %v98
  %vm107 = vcmask 130048
  %v108 = vsel %vm107, %v106, 0.0
  %v109 = vrot.slane %v108, 4
  %v110 = vadd.f32 %v108, %v109
  %v111 = vrot.slane %v110, 2
  %v112 = vadd.f32 %v110, %v111
  %v113 = vrot.slane %v112, 1
  %v114 = vadd.f32 %v112, %v113
  %v115 = vrcp.pop 8.0
  %v116 = vmul.f32 %v114, %v115
  %v117 = vmax.f32 %v116, 1e-05
  %v118 = vrcp.pop %v117
  %v119 = vmul.f32 %v98, %v118
  %120 = vxpose.xlu0.b32.start [1/16] %v119, 128
  %121 = vxpose.xlu0.b32.cont [2/16] 0.0, 128
  %122 = vxpose.xlu0.b32.cont [3/16] 0.0, 128
  %123 = vxpose.xlu0.b32.cont [4/16] 0.0, 128
  %124 = vxpose.xlu0.b32.cont [5/16] 0.0, 128
  %125 = vxpose.xlu0.b32.cont [6/16] 0.0, 128
  %126 = vxpose.xlu0.b32.cont [7/16] 0.0, 128
  %127 = vxpose.xlu0.b32.cont [8/16] 0.0, 128
  %128 = vxpose.xlu0.b32.cont [9/16] 0.0, 128
  %129 = vxpose.xlu0.b32.cont [10/16] 0.0, 128
  %130 = vxpose.xlu0.b32.cont [11/16] 0.0, 128
  %131 = vxpose.xlu0.b32.cont [12/16] 0.0, 128
  %132 = vxpose.xlu0.b32.cont [13/16] 0.0, 128
  %133 = vxpose.xlu0.b32.cont [14/16] 0.0, 128
  %134 = vxpose.xlu0.b32.cont [15/16] 0.0, 128
  %135 = vxpose.xlu0.b32.end [16/16] 0.0, 128
  %v136 = vpop.trf.xlu0
  %v137 = vpop.trf.xlu0
  %v138 = vpop.trf.xlu0
  %v139 = vpop.trf.xlu0
  %v140 = vpop.trf.xlu0
  %v141 = vpop.trf.xlu0
  %v142 = vpop.trf.xlu0
  %v143 = vpop.trf.xlu0
  %v144 = vpop.trf.xlu0
  %v145 = vpop.trf.xlu0
  %v146 = vpop.trf.xlu0
  %v147 = vpop.trf.xlu0
  %v148 = vpop.trf.xlu0
  %v149 = vpop.trf.xlu0
  %v150 = vpop.trf.xlu0
  %v151 = vpop.trf.xlu0
  %v152 = vand.u32 2147483647, %v103
  %v153 = vsel %vm107, %v152, 0.0
  %v154 = vrot.slane %v153, 4
  %v155 = vadd.f32 %v153, %v154
  %v156 = vrot.slane %v155, 2
  %v157 = vadd.f32 %v155, %v156
  %v158 = vrot.slane %v157, 1
  %v159 = vadd.f32 %v157, %v158
  %v160 = vmul.f32 %v159, %v115
  %v161 = vmax.f32 %v160, 1e-05
  %v162 = vrcp.pop %v161
  %v163 = vmul.f32 %v103, %v162
  %164 = vxpose.xlu0.b32.start [1/16] %v163, 128
  %165 = vxpose.xlu0.b32.cont [2/16] 0.0, 128
  %166 = vxpose.xlu0.b32.cont [3/16] 0.0, 128
  %167 = vxpose.xlu0.b32.cont [4/16] 0.0, 128
  %168 = vxpose.xlu0.b32.cont [5/16] 0.0, 128
  %169 = vxpose.xlu0.b32.cont [6/16] 0.0, 128
  %170 = vxpose.xlu0.b32.cont [7/16] 0.0, 128
  %171 = vxpose.xlu0.b32.cont [8/16] 0.0, 128
  %172 = vxpose.xlu0.b32.cont [9/16] 0.0, 128
  %173 = vxpose.xlu0.b32.cont [10/16] 0.0, 128
  %174 = vxpose.xlu0.b32.cont [11/16] 0.0, 128
  %175 = vxpose.xlu0.b32.cont [12/16] 0.0, 128
  %176 = vxpose.xlu0.b32.cont [13/16] 0.0, 128
  %177 = vxpose.xlu0.b32.cont [14/16] 0.0, 128
  %178 = vxpose.xlu0.b32.cont [15/16] 0.0, 128
  %179 = vxpose.xlu0.b32.end [16/16] 0.0, 128
  %v180 = vpop.trf.xlu0
  %v181 = vpop.trf.xlu0
  %v182 = vpop.trf.xlu0
  %v183 = vpop.trf.xlu0
  %v184 = vpop.trf.xlu0
  %v185 = vpop.trf.xlu0
  %v186 = vpop.trf.xlu0
  %v187 = vpop.trf.xlu0
  %v188 = vpop.trf.xlu0
  %v189 = vpop.trf.xlu0
  %v190 = vpop.trf.xlu0
  %v191 = vpop.trf.xlu0
  %v192 = vpop.trf.xlu0
  %v193 = vpop.trf.xlu0
  %v194 = vpop.trf.xlu0
  %v195 = vpop.trf.xlu0
  %v196 = vsel %vm27, %v117, %v161
  %v197 = vld [vmem:[%s1 + $0x18] sm:$0xff]
  %v198 = vld [vmem:[%s1 + $0x20] sm:$0x1]
  %v199 = vlaneseq
  %v200 = vshrl.u32 %v199, 7
  %v201 = vsub.s32 0, %v200
  %v202 = vrot.slane %v198, %v201
  %vm203 = vcmask 64512
  %v205 = vsel %vm203, %v136, 0
  %v208 = vsel %vm203, %v137, 0
  %v211 = vsel %vm203, %v180, 0
  %v214 = vsel %vm203, %v181, 0
  %216 = vmatprep.subr.mxu0 0.0
  %217 = vmatpush1.msra.mxu0 0.0
  %218 = vmatprep.subr.mxu0 0.0
  %219 = vmatpush1.msra.mxu0 0.0
  %220 = vmatprep.subr.mxu0 0.0
  %221 = vmatpush1.msra.mxu0 0.0
  %222 = vmatprep.subr.mxu0 0.0
  %223 = vmatpush1.msra.mxu0 0.0
  %224 = vmatprep.subr.mxu0 0.0
  %225 = vmatpush1.msra.mxu0 0.0
  %226 = vmatprep.subr.mxu0 0.0
  %227 = vmatpush1.msra.mxu0 0.0
  %228 = vmatprep.subr.mxu0 0.0
  %229 = vmatpush1.msra.mxu0 0.0
  %230 = vmatprep.subr.mxu0 0.0
  %231 = vmatpush1.msra.mxu0 0.0
  %232 = vmatprep.subr.mxu0 0.0
  %233 = vmatpush1.msra.mxu0 0.0
  %234 = vmatprep.subr.mxu0 0.0
  %235 = vmatpush1.msra.mxu0 0.0
  %236 = vmatprep.subr.mxu0 0.0
  %237 = vmatpush1.msra.mxu0 0.0
  %238 = vmatprep.subr.mxu0 0.0
  %239 = vmatpush1.msra.mxu0 0.0
  %240 = vmatprep.subr.mxu0 0.0
  %241 = vmatpush1.msra.mxu0 0.0
  %242 = vmatprep.subr.mxu0 0.0
  %243 = vmatpush1.msra.mxu0 0.0
  %244 = vmatprep.subr.mxu0 0.0
  %245 = vmatpush1.msra.mxu0 0.0
  %246 = vmatprep.subr.mxu0 0.0
  %247 = vmatpush1.msra.mxu0 %v197
  %248 = vmatprep.subr.mxu0 0.0
  %249 = vmatpush2.msra.mxu0 0.0
  %250 = vmatprep.subr.mxu0 0.0
  %251 = vmatpush2.msra.mxu0 0.0
  %252 = vmatprep.subr.mxu0 0.0
  %253 = vmatpush2.msra.mxu0 0.0
  %254 = vmatprep.subr.mxu0 0.0
  %255 = vmatpush2.msra.mxu0 0.0
  %256 = vmatprep.subr.mxu0 0.0
  %257 = vmatpush2.msra.mxu0 0.0
  %258 = vmatprep.subr.mxu0 0.0
  %259 = vmatpush2.msra.mxu0 0.0
  %260 = vmatprep.subr.mxu0 0.0
  %261 = vmatpush2.msra.mxu0 0.0
  %262 = vmatprep.subr.mxu0 0.0
  %263 = vmatpush2.msra.mxu0 0.0
  %264 = vmatprep.subr.mxu0 0.0
  %265 = vmatpush2.msra.mxu0 0.0
  %266 = vmatprep.subr.mxu0 0.0
  %267 = vmatpush2.msra.mxu0 0.0
  %268 = vmatprep.subr.mxu0 0.0
  %269 = vmatpush2.msra.mxu0 0.0
  %270 = vmatprep.subr.mxu0 0.0
  %271 = vmatpush2.msra.mxu0 0.0
  %272 = vmatprep.subr.mxu0 0.0
  %273 = vmatpush2.msra.mxu0 0.0
  %274 = vmatprep.subr.mxu0 0.0
  %275 = vmatpush2.msra.mxu0 0.0
  %276 = vmatprep.subr.mxu0 0.0
  %277 = vmatpush2.msra.mxu0 0.0
  %278 = vmatprep.subr.mxu0 0.0
  %279 = vmatpush2.msra.mxu0 0.0
  %280 = vmatprep.mubr.f32.mxu0 0.0
  %281 = vmatmul.mubr.f32.gmra.mxu0 %v205
  %v282 = vpop.f32.mrf.mxu0
  %v283 = vadd.f32 %v202, %v282
  %v284 = vpop.f32.mrf.mxu0
  %285 = vmatprep.mubr.f32.mxu0 0.0
  %286 = vmatmul.mubr.f32.gmra.mxu0 %v208
  %v287 = vpop.f32.mrf.mxu0
  %v288 = vadd.f32 %v202, %v287
  %v289 = vpop.f32.mrf.mxu0
  %290 = vmatprep.mubr.f32.mxu0 0.0
  %291 = vmatmul.mubr.f32.gmra.mxu0 %v211
  %v292 = vpop.f32.mrf.mxu0
  %v293 = vadd.f32 %v202, %v292
  %v294 = vpop.f32.mrf.mxu0
  %295 = vmatprep.mubr.f32.mxu0 0.0
  %296 = vmatmul.mubr.f32.gmra.mxu0 %v214
  %v297 = vpop.f32.mrf.mxu0
  %v298 = vadd.f32 %v202, %v297
  %v299 = vpop.f32.mrf.mxu0
  %300 = vdwg.mxu0
  %v301 = vmax.f32 %v283, 0.0
  %v302 = vmax.f32 %v288, 0.0
  %v303 = vmax.f32 %v293, 0.0
  %v304 = vmax.f32 %v298, 0.0
  %v305 = vld [vmem:[%s1 + $0x28] sm:$0xff]
  %v306 = vld [vmem:[%s1 + $0x30] sm:$0xff]
  %v307 = vld [vmem:[%s1 + $0x38] sm:$0xff]
  %v308 = vld [vmem:[%s1 + $0x40] sm:$0xff]
  %v309 = vld [vmem:[%s1 + $0x48] sm:$0x1]
  %v310 = vlaneseq
  %v311 = vshrl.u32 %v310, 7
  %v312 = vsub.s32 0, %v311
  %v313 = vrot.slane %v309, %v312
  %vm314 = vcmask 261120
  %v316 = vsel %vm314, %v301, 0
  %v319 = vsel %vm314, %v302, 0
  %v322 = vsel %vm314, %v303, 0
  %v325 = vsel %vm314, %v304, 0
  %327 = vmatprep.subr.mxu0 0.0
  %328 = vmatpush1.msra.mxu0 0.0
  %329 = vmatprep.subr.mxu0 0.0
  %330 = vmatpush1.msra.mxu0 0.0
  %331 = vmatprep.subr.mxu0 0.0
  %332 = vmatpush1.msra.mxu0 0.0
  %333 = vmatprep.subr.mxu0 0.0
  %334 = vmatpush1.msra.mxu0 0.0
  %335 = vmatprep.subr.mxu0 0.0
  %336 = vmatpush1.msra.mxu0 0.0
  %337 = vmatprep.subr.mxu0 0.0
  %338 = vmatpush1.msra.mxu0 0.0
  %339 = vmatprep.subr.mxu0 0.0
  %340 = vmatpush1.msra.mxu0 0.0
  %341 = vmatprep.subr.mxu0 0.0
  %342 = vmatpush1.msra.mxu0 0.0
  %343 = vmatprep.subr.mxu0 0.0
  %344 = vmatpush1.msra.mxu0 0.0
  %345 = vmatprep.subr.mxu0 0.0
  %346 = vmatpush1.msra.mxu0 0.0
  %347 = vmatprep.subr.mxu0 0.0
  %348 = vmatpush1.msra.mxu0 0.0
  %349 = vmatprep.subr.mxu0 0.0
  %350 = vmatpush1.msra.mxu0 0.0
  %351 = vmatprep.subr.mxu0 0.0
  %352 = vmatpush1.msra.mxu0 %v308
  %353 = vmatprep.subr.mxu0 0.0
  %354 = vmatpush1.msra.mxu0 %v307
  %355 = vmatprep.subr.mxu0 0.0
  %356 = vmatpush1.msra.mxu0 %v306
  %357 = vmatprep.subr.mxu0 0.0
  %358 = vmatpush1.msra.mxu0 %v305
  %359 = vmatprep.subr.mxu0 0.0
  %360 = vmatpush2.msra.mxu0 0.0
  %361 = vmatprep.subr.mxu0 0.0
  %362 = vmatpush2.msra.mxu0 0.0
  %363 = vmatprep.subr.mxu0 0.0
  %364 = vmatpush2.msra.mxu0 0.0
  %365 = vmatprep.subr.mxu0 0.0
  %366 = vmatpush2.msra.mxu0 0.0
  %367 = vmatprep.subr.mxu0 0.0
  %368 = vmatpush2.msra.mxu0 0.0
  %369 = vmatprep.subr.mxu0 0.0
  %370 = vmatpush2.msra.mxu0 0.0
  %371 = vmatprep.subr.mxu0 0.0
  %372 = vmatpush2.msra.mxu0 0.0
  %373 = vmatprep.subr.mxu0 0.0
  %374 = vmatpush2.msra.mxu0 0.0
  %375 = vmatprep.subr.mxu0 0.0
  %376 = vmatpush2.msra.mxu0 0.0
  %377 = vmatprep.subr.mxu0 0.0
  %378 = vmatpush2.msra.mxu0 0.0
  %379 = vmatprep.subr.mxu0 0.0
  %380 = vmatpush2.msra.mxu0 0.0
  %381 = vmatprep.subr.mxu0 0.0
  %382 = vmatpush2.msra.mxu0 0.0
  %383 = vmatprep.subr.mxu0 0.0
  %384 = vmatpush2.msra.mxu0 0.0
  %385 = vmatprep.subr.mxu0 0.0
  %386 = vmatpush2.msra.mxu0 0.0
  %387 = vmatprep.subr.mxu0 0.0
  %388 = vmatpush2.msra.mxu0 0.0
  %389 = vmatprep.subr.mxu0 0.0
  %390 = vmatpush2.msra.mxu0 0.0
  %391 = vmatprep.mubr.f32.mxu0 0.0
  %392 = vmatmul.mubr.f32.gmra.mxu0 %v316
  %v393 = vpop.f32.mrf.mxu0
  %v394 = vadd.f32 %v313, %v393
  %v395 = vpop.f32.mrf.mxu0
  %396 = vmatprep.mubr.f32.mxu0 0.0
  %397 = vmatmul.mubr.f32.gmra.mxu0 %v319
  %v398 = vpop.f32.mrf.mxu0
  %v399 = vadd.f32 %v313, %v398
  %v400 = vpop.f32.mrf.mxu0
  %401 = vmatprep.mubr.f32.mxu0 0.0
  %402 = vmatmul.mubr.f32.gmra.mxu0 %v322
  %v403 = vpop.f32.mrf.mxu0
  %v404 = vadd.f32 %v313, %v403
  %v405 = vpop.f32.mrf.mxu0
  %406 = vmatprep.mubr.f32.mxu0 0.0
  %407 = vmatmul.mubr.f32.gmra.mxu0 %v325
  %v408 = vpop.f32.mrf.mxu0
  %v409 = vadd.f32 %v313, %v408
  %v410 = vpop.f32.mrf.mxu0
  %411 = vdwg.mxu0
  %v412 = vmax.f32 %v394, 0.0
  %v413 = vmax.f32 %v399, 0.0
  %v414 = vmax.f32 %v404, 0.0
  %v415 = vmax.f32 %v409, 0.0
  %v416 = vld [vmem:[%s1 + $0x50] sm:$0xff]
  %v417 = vld [vmem:[%s1 + $0x58] sm:$0xff]
  %v418 = vld [vmem:[%s1 + $0x60] sm:$0x1]
  %v419 = vlaneseq
  %v420 = vshrl.u32 %v419, 7
  %v421 = vsub.s32 0, %v420
  %v422 = vrot.slane %v418, %v421
  %v424 = vsel %vm107, %v412, 0
  %v427 = vsel %vm107, %v413, 0
  %v430 = vsel %vm107, %v414, 0
  %v433 = vsel %vm107, %v415, 0
  %435 = vmatprep.subr.mxu0 0.0
  %436 = vmatpush1.msra.mxu0 0.0
  %437 = vmatprep.subr.mxu0 0.0
  %438 = vmatpush1.msra.mxu0 0.0
  %439 = vmatprep.subr.mxu0 0.0
  %440 = vmatpush1.msra.mxu0 0.0
  %441 = vmatprep.subr.mxu0 0.0
  %442 = vmatpush1.msra.mxu0 0.0
  %443 = vmatprep.subr.mxu0 0.0
  %444 = vmatpush1.msra.mxu0 0.0
  %445 = vmatprep.subr.mxu0 0.0
  %446 = vmatpush1.msra.mxu0 0.0
  %447 = vmatprep.subr.mxu0 0.0
  %448 = vmatpush1.msra.mxu0 0.0
  %449 = vmatprep.subr.mxu0 0.0
  %450 = vmatpush1.msra.mxu0 0.0
  %451 = vmatprep.subr.mxu0 0.0
  %452 = vmatpush1.msra.mxu0 0.0
  %453 = vmatprep.subr.mxu0 0.0
  %454 = vmatpush1.msra.mxu0 0.0
  %455 = vmatprep.subr.mxu0 0.0
  %456 = vmatpush1.msra.mxu0 0.0
  %457 = vmatprep.subr.mxu0 0.0
  %458 = vmatpush1.msra.mxu0 0.0
  %459 = vmatprep.subr.mxu0 0.0
  %460 = vmatpush1.msra.mxu0 0.0
  %461 = vmatprep.subr.mxu0 0.0
  %462 = vmatpush1.msra.mxu0 0.0
  %463 = vmatprep.subr.mxu0 0.0
  %464 = vmatpush1.msra.mxu0 %v417
  %465 = vmatprep.subr.mxu0 0.0
  %466 = vmatpush1.msra.mxu0 %v416
  %467 = vmatprep.subr.mxu0 0.0
  %468 = vmatpush2.msra.mxu0 0.0
  %469 = vmatprep.subr.mxu0 0.0
  %470 = vmatpush2.msra.mxu0 0.0
  %471 = vmatprep.subr.mxu0 0.0
  %472 = vmatpush2.msra.mxu0 0.0
  %473 = vmatprep.subr.mxu0 0.0
  %474 = vmatpush2.msra.mxu0 0.0
  %475 = vmatprep.subr.mxu0 0.0
  %476 = vmatpush2.msra.mxu0 0.0
  %477 = vmatprep.subr.mxu0 0.0
  %478 = vmatpush2.msra.mxu0 0.0
  %479 = vmatprep.subr.mxu0 0.0
  %480 = vmatpush2.msra.mxu0 0.0
  %481 = vmatprep.subr.mxu0 0.0
  %482 = vmatpush2.msra.mxu0 0.0
  %483 = vmatprep.subr.mxu0 0.0
  %484 = vmatpush2.msra.mxu0 0.0
  %485 = vmatprep.subr.mxu0 0.0
  %486 = vmatpush2.msra.mxu0 0.0
  %487 = vmatprep.subr.mxu0 0.0
  %488 = vmatpush2.msra.mxu0 0.0
  %489 = vmatprep.subr.mxu0 0.0
  %490 = vmatpush2.msra.mxu0 0.0
  %491 = vmatprep.subr.mxu0 0.0
  %492 = vmatpush2.msra.mxu0 0.0
  %493 = vmatprep.subr.mxu0 0.0
  %494 = vmatpush2.msra.mxu0 0.0
  %495 = vmatprep.subr.mxu0 0.0
  %496 = vmatpush2.msra.mxu0 0.0
  %497 = vmatprep.subr.mxu0 0.0
  %498 = vmatpush2.msra.mxu0 0.0
  %499 = vmatprep.mubr.f32.mxu0 0.0
  %500 = vmatmul.mubr.f32.gmra.mxu0 %v424
  %v501 = vpop.f32.mrf.mxu0
  %v502 = vadd.f32 %v422, %v501
  %v503 = vpop.f32.mrf.mxu0
  %504 = vmatprep.mubr.f32.mxu0 0.0
  %505 = vmatmul.mubr.f32.gmra.mxu0 %v427
  %v506 = vpop.f32.mrf.mxu0
  %v507 = vadd.f32 %v422, %v506
  %v508 = vpop.f32.mrf.mxu0
  %509 = vmatprep.mubr.f32.mxu0 0.0
  %510 = vmatmul.mubr.f32.gmra.mxu0 %v430
  %v511 = vpop.f32.mrf.mxu0
  %v512 = vadd.f32 %v422, %v511
  %v513 = vpop.f32.mrf.mxu0
  %514 = vmatprep.mubr.f32.mxu0 0.0
  %515 = vmatmul.mubr.f32.gmra.mxu0 %v433
  %v516 = vpop.f32.mrf.mxu0
  %v517 = vadd.f32 %v422, %v516
  %v518 = vpop.f32.mrf.mxu0
  %519 = vdwg.mxu0
  %v520 = vld [vmem:[%s1 + $0x68] sm:$0x3f]
  %v522 = vsel %vm314, %v520, 0
  %524 = vmatprep.subr.mxu0 0.0
  %525 = vmatpush1.msra.mxu0 0.0
  %526 = vmatprep.subr.mxu0 0.0
  %527 = vmatpush1.msra.mxu0 0.0
  %528 = vmatprep.subr.mxu0 0.0
  %529 = vmatpush1.msra.mxu0 0.0
  %530 = vmatprep.subr.mxu0 0.0
  %531 = vmatpush1.msra.mxu0 0.0
  %532 = vmatprep.subr.mxu0 0.0
  %533 = vmatpush1.msra.mxu0 0.0
  %534 = vmatprep.subr.mxu0 0.0
  %535 = vmatpush1.msra.mxu0 0.0
  %536 = vmatprep.subr.mxu0 0.0
  %537 = vmatpush1.msra.mxu0 0.0
  %538 = vmatprep.subr.mxu0 0.0
  %539 = vmatpush1.msra.mxu0 0.0
  %540 = vmatprep.subr.mxu0 0.0
  %541 = vmatpush1.msra.mxu0 0.0
  %542 = vmatprep.subr.mxu0 0.0
  %543 = vmatpush1.msra.mxu0 0.0
  %544 = vmatprep.subr.mxu0 0.0
  %545 = vmatpush1.msra.mxu0 0.0
  %546 = vmatprep.subr.mxu0 0.0
  %547 = vmatpush1.msra.mxu0 0.0
  %548 = vmatprep.subr.mxu0 0.0
  %549 = vmatpush1.msra.mxu0 %v517
  %550 = vmatprep.subr.mxu0 0.0
  %551 = vmatpush1.msra.mxu0 %v512
  %552 = vmatprep.subr.mxu0 0.0
  %553 = vmatpush1.msra.mxu0 %v507
  %554 = vmatprep.subr.mxu0 0.0
  %555 = vmatpush1.msra.mxu0 %v502
  %556 = vmatprep.subr.mxu0 0.0
  %557 = vmatpush2.msra.mxu0 0.0
  %558 = vmatprep.subr.mxu0 0.0
  %559 = vmatpush2.msra.mxu0 0.0
  %560 = vmatprep.subr.mxu0 0.0
  %561 = vmatpush2.msra.mxu0 0.0
  %562 = vmatprep.subr.mxu0 0.0
  %563 = vmatpush2.msra.mxu0 0.0
  %564 = vmatprep.subr.mxu0 0.0
  %565 = vmatpush2.msra.mxu0 0.0
  %566 = vmatprep.subr.mxu0 0.0
  %567 = vmatpush2.msra.mxu0 0.0
  %568 = vmatprep.subr.mxu0 0.0
  %569 = vmatpush2.msra.mxu0 0.0
  %570 = vmatprep.subr.mxu0 0.0
  %571 = vmatpush2.msra.mxu0 0.0
  %572 = vmatprep.subr.mxu0 0.0
  %573 = vmatpush2.msra.mxu0 0.0
  %574 = vmatprep.subr.mxu0 0.0
  %575 = vmatpush2.msra.mxu0 0.0
  %576 = vmatprep.subr.mxu0 0.0
  %577 = vmatpush2.msra.mxu0 0.0
  %578 = vmatprep.subr.mxu0 0.0
  %579 = vmatpush2.msra.mxu0 0.0
  %580 = vmatprep.subr.mxu0 0.0
  %581 = vmatpush2.msra.mxu0 0.0
  %582 = vmatprep.subr.mxu0 0.0
  %583 = vmatpush2.msra.mxu0 0.0
  %584 = vmatprep.subr.mxu0 0.0
  %585 = vmatpush2.msra.mxu0 0.0
  %586 = vmatprep.subr.mxu0 0.0
  %587 = vmatpush2.msra.mxu0 0.0
  %588 = vmatprep.mubr.f32.mxu0 0.0
  %589 = vmatmul.mubr.f32.gmra.mxu0 %v522
  %v590 = vpop.f32.mrf.mxu0
  %v591 = vadd.f32 0.0, %v590
  %v592 = vpop.f32.mrf.mxu0
  %593 = vdwg.mxu0
  %v594 = vld [vmem:[%s1 + $0x70] sm:$0xff]
  %v595 = vld [vmem:[%s1 + $0x78] sm:$0xff]
  %v596 = vld [vmem:[%s1 + $0x80] sm:$0xff]
  %v597 = vld [vmem:[%s1 + $0x88] sm:$0xff]
  %v598 = vld [vmem:[%s1 + $0x90] sm:$0x3f]
  %v600 = vsel %vm314, %v591, 0
  %602 = vmatprep.subr.mxu0 0.0
  %603 = vmatpush1.msra.mxu0 0.0
  %604 = vmatprep.subr.mxu0 0.0
  %605 = vmatpush1.msra.mxu0 0.0
  %606 = vmatprep.subr.mxu0 0.0
  %607 = vmatpush1.msra.mxu0 0.0
  %608 = vmatprep.subr.mxu0 0.0
  %609 = vmatpush1.msra.mxu0 0.0
  %610 = vmatprep.subr.mxu0 0.0
  %611 = vmatpush1.msra.mxu0 0.0
  %612 = vmatprep.subr.mxu0 0.0
  %613 = vmatpush1.msra.mxu0 0.0
  %614 = vmatprep.subr.mxu0 0.0
  %615 = vmatpush1.msra.mxu0 0.0
  %616 = vmatprep.subr.mxu0 0.0
  %617 = vmatpush1.msra.mxu0 0.0
  %618 = vmatprep.subr.mxu0 0.0
  %619 = vmatpush1.msra.mxu0 0.0
  %620 = vmatprep.subr.mxu0 0.0
  %621 = vmatpush1.msra.mxu0 0.0
  %622 = vmatprep.subr.mxu0 0.0
  %623 = vmatpush1.msra.mxu0 0.0
  %624 = vmatprep.subr.mxu0 0.0
  %625 = vmatpush1.msra.mxu0 0.0
  %626 = vmatprep.subr.mxu0 0.0
  %627 = vmatpush1.msra.mxu0 %v597
  %628 = vmatprep.subr.mxu0 0.0
  %629 = vmatpush1.msra.mxu0 %v596
  %630 = vmatprep.subr.mxu0 0.0
  %631 = vmatpush1.msra.mxu0 %v595
  %632 = vmatprep.subr.mxu0 0.0
  %633 = vmatpush1.msra.mxu0 %v594
  %634 = vmatprep.subr.mxu0 0.0
  %635 = vmatpush2.msra.mxu0 0.0
  %636 = vmatprep.subr.mxu0 0.0
  %637 = vmatpush2.msra.mxu0 0.0
  %638 = vmatprep.subr.mxu0 0.0
  %639 = vmatpush2.msra.mxu0 0.0
  %640 = vmatprep.subr.mxu0 0.0
  %641 = vmatpush2.msra.mxu0 0.0
  %642 = vmatprep.subr.mxu0 0.0
  %643 = vmatpush2.msra.mxu0 0.0
  %644 = vmatprep.subr.mxu0 0.0
  %645 = vmatpush2.msra.mxu0 0.0
  %646 = vmatprep.subr.mxu0 0.0
  %647 = vmatpush2.msra.mxu0 0.0
  %648 = vmatprep.subr.mxu0 0.0
  %649 = vmatpush2.msra.mxu0 0.0
  %650 = vmatprep.subr.mxu0 0.0
  %651 = vmatpush2.msra.mxu0 0.0
  %652 = vmatprep.subr.mxu0 0.0
  %653 = vmatpush2.msra.mxu0 0.0
  %654 = vmatprep.subr.mxu0 0.0
  %655 = vmatpush2.msra.mxu0 0.0
  %656 = vmatprep.subr.mxu0 0.0
  %657 = vmatpush2.msra.mxu0 0.0
  %658 = vmatprep.subr.mxu0 0.0
  %659 = vmatpush2.msra.mxu0 0.0
  %660 = vmatprep.subr.mxu0 0.0
  %661 = vmatpush2.msra.mxu0 0.0
  %662 = vmatprep.subr.mxu0 0.0
  %663 = vmatpush2.msra.mxu0 0.0
  %664 = vmatprep.subr.mxu0 0.0
  %665 = vmatpush2.msra.mxu0 0.0
  %666 = vmatprep.mubr.f32.mxu0 0.0
  %667 = vmatmul.mubr.f32.gmra.mxu0 %v600
  %v668 = vpop.f32.mrf.mxu0
  %v669 = vadd.f32 %v598, %v668
  %v670 = vpop.f32.mrf.mxu0
  %671 = vdwg.mxu0
  %v672 = vmax.f32 %v669, 0.0
  %v673 = vand.u32 2147483647, %v669
  %v674 = vsub.f32 0.0, %v673
  %v675 = vmul.f32 %v674, 1.442695
  %v676 = vpow.pop %v675
  %v677 = vadd.f32 %v676, 1.0
  %v678 = vlog2.pop %v677
  %v679 = vmul.f32 %v678, 0.6931472
  %v680 = vadd.f32 %v672, %v679
  %v681 = vlaneseq
  %v682 = vand.u32 %v681, 127
  %vm683 = vcmp.lt.s32.totalorder %v682, 0
  %v684 = vsub.s32 0, %v682
  %v685 = vsel %vm683, %v684, %v682
  %v686 = vmul.u32.u64.compose %v685, 2863311531
  %v687 = vextract.low.u32 %v686
  %v688 = vextract.high.u32 %v686
  %v689 = vshrl.u32 %v688, 1
  %v690 = vmul.u32 %v689, 3
  %v691 = vsub.s32 %v685, %v690
  %v692 = vsub.s32 0, %v691
  %v693 = vsel %vm683, %v692, %v691
  %vm694 = vcmp.ne.s32.totalorder %v693, 0
  %vm695 = vcmp.lt.s32.totalorder %v693, 0
  %vm696 = vmand %vm695, %vm694
  %v697 = vadd.s32 %v693, 3
  %v698 = vsel %vm696, %v697, %v693
  %vm699 = vcmp.eq.s32.totalorder %v698, 0
  %v700 = vadd.f32 %v680, 2.0
  %vm701 = vcmp.eq.s32.totalorder %v698, 1
  %v702 = vsel %vm701, %v669, %v680
  %v703 = vsel %vm699, %v700, %v702
  %vm704 = vcmask 123904
  %705 = vst.msk [vmem:[%s2] sm:$0x3] %vm704, %v196
  %vm706 = vcmask 46080
  %707 = vst.msk [vmem:[%s2 + $0x8] sm:$0x3f] %vm706, %v703
  // Predicated region
  $region10: #{mlp_proba_forward.1} parent=0 // pred_check
    _
  $region11: #{mlp_proba_forward.1} parent=0 // pred_check_branch
    %709 = sbr.rel (0) target = $region13
  $region12: #{mlp_proba_forward.1} parent=0 // pred_region
    _
  $region13: #{mlp_proba_forward.1} parent=0 // pred_fallthru
    _
  // Predicated region
  $region14: #{mlp_proba_forward.1} parent=0 // pred_check
    _
  $region15: #{mlp_proba_forward.1} parent=0 // pred_check_branch
    %711 = sbr.rel (0) target = $region17
  $region16: #{mlp_proba_forward.1} parent=0 // pred_region
    _
  $region17: #{mlp_proba_forward.1} parent=0 // pred_fallthru
    _

</llo_original>
